<compile_context>
chip_gen: v7x
topology: tpu7x:2x2x1
jax: 0.10.0
libtpu: 0.0.40
codegen_flags: <defaults>
</compile_context>

<pallas_src>
import functools

import jax
import jax.numpy as jnp
from jax.experimental import pallas as pl
from jax.experimental.pallas import tpu as pltpu

MIN_VALUE = 1e-08
HIDDEN = 256


def _round_up(a, b):
    return (a + b - 1) // b * b


def _gauss_split_kernel(
    x_ref,
    w1_ref, b1_ref,
    w2_ref, b2_ref,
    w3_ref, b3_ref,
    wh_ref, bh_ref,
    out_ref,
    *, y_dim,
):
    x = x_ref[...]                                                  # bf16 [tn, in_pad]

    # embed: 3x fused (Linear+BN) -> ReLU   (BN already folded into W/b)
    h = jnp.dot(x, w1_ref[...], preferred_element_type=jnp.float32) + b1_ref[...]
    h = jnp.maximum(h, 0.0).astype(jnp.bfloat16)
    h = jnp.dot(h, w2_ref[...], preferred_element_type=jnp.float32) + b2_ref[...]
    h = jnp.maximum(h, 0.0).astype(jnp.bfloat16)
    h = jnp.dot(h, w3_ref[...], preferred_element_type=jnp.float32) + b3_ref[...]
    h = jnp.maximum(h, 0.0).astype(jnp.bfloat16)

    # fused heads: one lane-dense matmul [tn, head_pad]
    out = jnp.dot(h, wh_ref[...], preferred_element_type=jnp.float32) + bh_ref[...]

    # softplus(d) + MIN_VALUE only on the diag lanes [y_dim, 2*y_dim)
    lane = jax.lax.broadcasted_iota(jnp.int32, out.shape, 1)
    is_diag = (lane >= y_dim) & (lane < 2 * y_dim)
    sp = jnp.maximum(out, 0.0) + jnp.log1p(jnp.exp(-jnp.abs(out))) + MIN_VALUE
    out_ref[...] = jnp.where(is_diag, sp, out)


def _fold_bn(w, b, gamma, beta, mean, var, eps=1e-5):
    """Fold eval-mode BatchNorm1d into the preceding Linear (glue)."""
    g = gamma / jnp.sqrt(var + eps)          # [out]
    w_f = w * g[None, :]                     # [in, out]
    b_f = (b - mean) * g + beta              # [out]
    return w_f, b_f


@functools.partial(jax.jit, static_argnames=("y_dim", "diag_cov"))
def gaussian_regressor_split_forward(x, params, *, y_dim, diag_cov=False):
    """x: [n, input_dim] float32 -> (loc [n, y_dim], scale_tril [n, y_dim, y_dim])."""
    n, input_dim = x.shape
    n_off = y_dim * (y_dim - 1) // 2
    head_dim = 2 * y_dim + n_off
    head_pad = max(128, _round_up(head_dim, 128))
    in_pad = max(128, _round_up(input_dim, 128))

    # Fold BN into each trunk Linear (f32), then cast weights to bf16.
    w1, b1 = _fold_bn(params["w1"], params["b1"], params["g1"], params["bt1"],
                      params["m1"], params["v1"])
    w2, b2 = _fold_bn(params["w2"], params["b2"], params["g2"], params["bt2"],
                      params["m2"], params["v2"])
    w3, b3 = _fold_bn(params["w3"], params["b3"], params["g3"], params["bt3"],
                      params["m3"], params["v3"])

    w1p = jnp.pad(w1, ((0, in_pad - input_dim), (0, 0))).astype(jnp.bfloat16)
    w2b = w2.astype(jnp.bfloat16)
    w3b = w3.astype(jnp.bfloat16)

    # Fuse + lane-pad the three heads into one weight / bias.
    wh = jnp.concatenate([params["wloc"], params["wdiag"], params["woff"]], axis=1)
    wh = jnp.pad(wh, ((0, 0), (0, head_pad - head_dim))).astype(jnp.bfloat16)
    bh = jnp.concatenate([params["bloc"], params["bdiag"], params["boff"]])
    bh = jnp.pad(bh, (0, head_pad - head_dim)).reshape(1, head_pad)

    b1r = b1.reshape(1, HIDDEN)
    b2r = b2.reshape(1, HIDDEN)
    b3r = b3.reshape(1, HIDDEN)

    # Batch tile: large (up to 512 rows) but sized from the actual batch so
    # small batches don't pay for padding; multiple of 16 for bf16 sublanes.
    tile_n = min(512, _round_up(n, 16))
    n_pad = _round_up(n, tile_n)
    x_p = jnp.pad(x, ((0, n_pad - n), (0, in_pad - input_dim))).astype(jnp.bfloat16)

    grid = (n_pad // tile_n,)

    def row_spec(feat):
        return pl.BlockSpec((tile_n, feat), lambda i: (i, 0))

    def full_spec(shape):
        # Grid-invariant operands (weights / biases).  NOTE: Buffered(1)
        # single-buffering was skipped; VMEM footprint is <2 MiB regardless.
        return pl.BlockSpec(shape, lambda i: (0,) * len(shape))

    in_specs = [
        row_spec(in_pad),                                          # x
        full_spec((in_pad, HIDDEN)),  full_spec((1, HIDDEN)),      # w1, b1
        full_spec((HIDDEN, HIDDEN)),  full_spec((1, HIDDEN)),      # w2, b2
        full_spec((HIDDEN, HIDDEN)),  full_spec((1, HIDDEN)),      # w3, b3
        full_spec((HIDDEN, head_pad)), full_spec((1, head_pad)),   # fused head
    ]
    out_specs = row_spec(head_pad)
    out_shape = jax.ShapeDtypeStruct((n_pad, head_pad), jnp.float32)

    out_p = pl.pallas_call(
        functools.partial(_gauss_split_kernel, y_dim=y_dim),
        out_shape=out_shape,
        grid_spec=pltpu.PrefetchScalarGridSpec(
            num_scalar_prefetch=0,
            grid=grid,
            in_specs=in_specs,
            out_specs=out_specs,
        ),
        compiler_params=pltpu.CompilerParams(
            dimension_semantics=("parallel",)
        ),
    )(
        x_p,
        w1p, b1r,
        w2b, b2r,
        w3b, b3r,
        wh, bh,
    )

    out = out_p[:n]
    loc = out[:, :y_dim]
    diag = out[:, y_dim:2 * y_dim]

    # Glue: diag_embed + lower-triangular (offset=-1) scatter.
    scale_tril = jax.vmap(jnp.diag)(diag)                          # [n, y_dim, y_dim]
    if not diag_cov and y_dim > 1:
        off = out[:, 2 * y_dim:head_dim]
        r, c = jnp.tril_indices(y_dim, k=-1)                       # row-major, same as torch
        scale_tril = scale_tril.at[:, r, c].set(off)
    return loc, scale_tril


def make_params(key, input_dim, y_dim, zero_init_scale_tril=True):
    """Deterministic synthetic parameter init (shapes match the PyTorch module)."""
    n_off = y_dim * (y_dim - 1) // 2
    ks = jax.random.split(key, 24)
    k = iter(ks)

    def lin(kin, fan_in, fan_out):
        kw, kb = jax.random.split(kin)
        bound = 1.0 / jnp.sqrt(fan_in)
        w = jax.random.uniform(kw, (fan_in, fan_out), jnp.float32, -bound, bound)
        b = jax.random.uniform(kb, (fan_out,), jnp.float32, -bound, bound)
        return w, b

    def bn(kin, dim):
        k1, k2, k3, k4 = jax.random.split(kin, 4)
        gamma = 1.0 + 0.1 * jax.random.normal(k1, (dim,), jnp.float32)
        beta = 0.1 * jax.random.normal(k2, (dim,), jnp.float32)
        mean = 0.1 * jax.random.normal(k3, (dim,), jnp.float32)
        var = jax.random.uniform(k4, (dim,), jnp.float32, 0.5, 1.5)
        return gamma, beta, mean, var

    p = {}
    p["w1"], p["b1"] = lin(next(k), input_dim, HIDDEN)
    p["g1"], p["bt1"], p["m1"], p["v1"] = bn(next(k), HIDDEN)
    p["w2"], p["b2"] = lin(next(k), HIDDEN, HIDDEN)
    p["g2"], p["bt2"], p["m2"], p["v2"] = bn(next(k), HIDDEN)
    p["w3"], p["b3"] = lin(next(k), HIDDEN, HIDDEN)
    p["g3"], p["bt3"], p["m3"], p["v3"] = bn(next(k), HIDDEN)
    p["wloc"], p["bloc"] = lin(next(k), HIDDEN, y_dim)
    p["wdiag"], p["bdiag"] = lin(next(k), HIDDEN, y_dim)
    if zero_init_scale_tril:
        p["woff"] = jnp.zeros((HIDDEN, n_off), jnp.float32)
        p["boff"] = jnp.zeros((n_off,), jnp.float32)
    else:
        p["woff"], p["boff"] = lin(next(k), HIDDEN, n_off)
    return p


def _reference_forward_f32(x, params, y_dim, diag_cov=False):
    """Pure-JAX f32 reference (module semantics)."""
    w1, b1 = _fold_bn(params["w1"], params["b1"], params["g1"], params["bt1"],
                      params["m1"], params["v1"])
    w2, b2 = _fold_bn(params["w2"], params["b2"], params["g2"], params["bt2"],
                      params["m2"], params["v2"])
    w3, b3 = _fold_bn(params["w3"], params["b3"], params["g3"], params["bt3"],
                      params["m3"], params["v3"])
    h = jnp.maximum(x @ w1 + b1, 0.0)
    h = jnp.maximum(h @ w2 + b2, 0.0)
    h = jnp.maximum(h @ w3 + b3, 0.0)
    loc = h @ params["wloc"] + params["bloc"]
    d = h @ params["wdiag"] + params["bdiag"]
    diag = jax.nn.softplus(d) + MIN_VALUE
    off = h @ params["woff"] + params["boff"]
    st = jax.vmap(jnp.diag)(diag)
    if not diag_cov and y_dim > 1:
        r, c = jnp.tril_indices(y_dim, k=-1)
        st = st.at[:, r, c].set(off)
    return loc, st


def _reference_forward_bf16(x, params, y_dim, diag_cov=False):
    """Pure-JAX reference with the same bf16 casts / f32 accumulation as the kernel."""
    bf = jnp.bfloat16
    w1, b1 = _fold_bn(params["w1"], params["b1"], params["g1"], params["bt1"],
                      params["m1"], params["v1"])
    w2, b2 = _fold_bn(params["w2"], params["b2"], params["g2"], params["bt2"],
                      params["m2"], params["v2"])
    w3, b3 = _fold_bn(params["w3"], params["b3"], params["g3"], params["bt3"],
                      params["m3"], params["v3"])
    h = jnp.dot(x.astype(bf), w1.astype(bf), preferred_element_type=jnp.float32) + b1
    h = jnp.maximum(h, 0.0)
    h = jnp.dot(h.astype(bf), w2.astype(bf), preferred_element_type=jnp.float32) + b2
    h = jnp.maximum(h, 0.0)
    h = jnp.dot(h.astype(bf), w3.astype(bf), preferred_element_type=jnp.float32) + b3
    h = jnp.maximum(h, 0.0)
    wh = jnp.concatenate([params["wloc"], params["wdiag"], params["woff"]], axis=1)
    bh = jnp.concatenate([params["bloc"], params["bdiag"], params["boff"]])
    out = jnp.dot(h.astype(bf), wh.astype(bf), preferred_element_type=jnp.float32) + bh
    loc = out[:, :y_dim]
    diag = jax.nn.softplus(out[:, y_dim:2 * y_dim]) + MIN_VALUE
    st = jax.vmap(jnp.diag)(diag)
    if not diag_cov and y_dim > 1:
        r, c = jnp.tril_indices(y_dim, k=-1)
        st = st.at[:, r, c].set(out[:, 2 * y_dim:])
    return loc, st


if __name__ == "__main__":
    key = jax.random.PRNGKey(0)
    k_param, k_x = jax.random.split(key)

    batch, input_dim, y_dim = 8, 32, 4
    params = make_params(k_param, input_dim, y_dim, zero_init_scale_tril=True)
    x = jax.random.normal(k_x, (batch, input_dim), jnp.float32)

    loc, scale_tril = gaussian_regressor_split_forward(x, params, y_dim=y_dim)
    loc, scale_tril = jax.block_until_ready((loc, scale_tril))

    assert loc.shape == (batch, y_dim)
    assert scale_tril.shape == (batch, y_dim, y_dim)

    # Exact-path check: same bf16 quantization / f32 accumulation as the kernel.
    loc_bf, st_bf = _reference_forward_bf16(x, params, y_dim)
    assert jnp.allclose(loc, loc_bf, atol=1e-4, rtol=1e-4)
    assert jnp.allclose(scale_tril, st_bf, atol=1e-4, rtol=1e-4)

    # Loose sanity check against the full-f32 module semantics (bf16 weights
    # with f32 accumulation -> ~1e-2-level agreement expected).
    loc_f32, st_f32 = _reference_forward_f32(x, params, y_dim)
    assert jnp.allclose(loc, loc_f32, atol=5e-2, rtol=5e-2)
    assert jnp.allclose(scale_tril, st_f32, atol=5e-2, rtol=5e-2)

    print("KERNEL_OK")
</pallas_src>

<mosaic_0001>
module attributes {stable_mosaic.version = 11 : i64} {
  func.func private @main(%arg0: i32) attributes {dimension_semantics = [#tpu.dimension_semantics<core_parallel>], iteration_bounds = array<i64: 2>, tpu.core_type = #tpu.core_type<sc_scalar_subcore>, window_params = []} {
    return
  }
}

module attributes {stable_mosaic.version = 11 : i64} {
  func.func private @main(%arg0: i32) attributes {dimension_semantics = [#tpu.dimension_semantics<core_parallel>], iteration_bounds = array<i64: 2>, tpu.core_type = #tpu.core_type<sc_scalar_subcore>, window_params = []} {
    return
  }
}

module attributes {stable_mosaic.version = 11 : i64} {
  func.func @_gauss_split_kernel(%arg0: i32, %arg1: memref<16x128xbf16, #tpu.memory_space<vmem>>, %arg2: memref<128x256xbf16, #tpu.memory_space<vmem>>, %arg3: memref<1x256xf32, #tpu.memory_space<vmem>>, %arg4: memref<256x256xbf16, #tpu.memory_space<vmem>>, %arg5: memref<1x256xf32, #tpu.memory_space<vmem>>, %arg6: memref<256x256xbf16, #tpu.memory_space<vmem>>, %arg7: memref<1x256xf32, #tpu.memory_space<vmem>>, %arg8: memref<256x128xbf16, #tpu.memory_space<vmem>>, %arg9: memref<1x128xf32, #tpu.memory_space<vmem>>, %arg10: memref<16x128xf32, #tpu.memory_space<vmem>>) attributes {dimension_semantics = [#tpu.dimension_semantics<parallel>], iteration_bounds = array<i64: 1>, scalar_prefetch = 0 : i64, scratch_operands = 0 : i64, tpu.core_type = #tpu.core_type<tc>, window_params = [{transform_indices = @transform_0, window_bounds = array<i64: 16, 128>}, {pipeline_mode = #tpu.pipeline_mode<synchronous>, transform_indices = @transform_1, window_bounds = array<i64: 128, 256>}, {pipeline_mode = #tpu.pipeline_mode<synchronous>, transform_indices = @transform_2, window_bounds = array<i64: 1, 256>}, {pipeline_mode = #tpu.pipeline_mode<synchronous>, transform_indices = @transform_3, window_bounds = array<i64: 256, 256>}, {pipeline_mode = #tpu.pipeline_mode<synchronous>, transform_indices = @transform_4, window_bounds = array<i64: 1, 256>}, {pipeline_mode = #tpu.pipeline_mode<synchronous>, transform_indices = @transform_5, window_bounds = array<i64: 256, 256>}, {pipeline_mode = #tpu.pipeline_mode<synchronous>, transform_indices = @transform_6, window_bounds = array<i64: 1, 256>}, {pipeline_mode = #tpu.pipeline_mode<synchronous>, transform_indices = @transform_7, window_bounds = array<i64: 256, 128>}, {pipeline_mode = #tpu.pipeline_mode<synchronous>, transform_indices = @transform_8, window_bounds = array<i64: 1, 128>}, {transform_indices = @transform_9, window_bounds = array<i64: 16, 128>}]} {
    %c0 = arith.constant 0 : index
    %c0_0 = arith.constant 0 : index
    %0 = vector.load %arg1[%c0, %c0_0] : memref<16x128xbf16, #tpu.memory_space<vmem>>, vector<16x128xbf16>
    %c0_1 = arith.constant 0 : index
    %c0_2 = arith.constant 0 : index
    %1 = vector.load %arg2[%c0_1, %c0_2] : memref<128x256xbf16, #tpu.memory_space<vmem>>, vector<128x256xbf16>
    %cst = arith.constant dense<0.000000e+00> : vector<16x256xf32>
    %2 = tpu.matmul %0, %1, %cst {dimension_numbers = #tpu.dot_dimension_numbers<[1], [0], [0], [1], [0, 0, 1, 1], [], []>} : vector<16x128xbf16>, vector<128x256xbf16>, vector<16x256xf32> -> vector<16x256xf32>
    %c0_3 = arith.constant 0 : index
    %c0_4 = arith.constant 0 : index
    %3 = vector.load %arg3[%c0_3, %c0_4] : memref<1x256xf32, #tpu.memory_space<vmem>>, vector<1x256xf32>
    %4 = vector.broadcast %3 : vector<1x256xf32> to vector<16x256xf32>
    %5 = arith.addf %2, %4 : vector<16x256xf32>
    %cst_5 = arith.constant 0.000000e+00 : f32
    %6 = vector.broadcast %cst_5 : f32 to vector<16x256xf32>
    %7 = arith.maximumf %5, %6 : vector<16x256xf32>
    %8 = arith.truncf %7 : vector<16x256xf32> to vector<16x256xbf16>
    %c0_6 = arith.constant 0 : index
    %c0_7 = arith.constant 0 : index
    %9 = vector.load %arg4[%c0_6, %c0_7] : memref<256x256xbf16, #tpu.memory_space<vmem>>, vector<256x256xbf16>
    %cst_8 = arith.constant dense<0.000000e+00> : vector<16x256xf32>
    %10 = tpu.matmul %8, %9, %cst_8 {dimension_numbers = #tpu.dot_dimension_numbers<[1], [0], [0], [1], [0, 0, 1, 1], [], []>} : vector<16x256xbf16>, vector<256x256xbf16>, vector<16x256xf32> -> vector<16x256xf32>
    %c0_9 = arith.constant 0 : index
    %c0_10 = arith.constant 0 : index
    %11 = vector.load %arg5[%c0_9, %c0_10] : memref<1x256xf32, #tpu.memory_space<vmem>>, vector<1x256xf32>
    %12 = vector.broadcast %11 : vector<1x256xf32> to vector<16x256xf32>
    %13 = arith.addf %10, %12 : vector<16x256xf32>
    %cst_11 = arith.constant 0.000000e+00 : f32
    %14 = vector.broadcast %cst_11 : f32 to vector<16x256xf32>
    %15 = arith.maximumf %13, %14 : vector<16x256xf32>
    %16 = arith.truncf %15 : vector<16x256xf32> to vector<16x256xbf16>
    %c0_12 = arith.constant 0 : index
    %c0_13 = arith.constant 0 : index
    %17 = vector.load %arg6[%c0_12, %c0_13] : memref<256x256xbf16, #tpu.memory_space<vmem>>, vector<256x256xbf16>
    %cst_14 = arith.constant dense<0.000000e+00> : vector<16x256xf32>
    %18 = tpu.matmul %16, %17, %cst_14 {dimension_numbers = #tpu.dot_dimension_numbers<[1], [0], [0], [1], [0, 0, 1, 1], [], []>} : vector<16x256xbf16>, vector<256x256xbf16>, vector<16x256xf32> -> vector<16x256xf32>
    %c0_15 = arith.constant 0 : index
    %c0_16 = arith.constant 0 : index
    %19 = vector.load %arg7[%c0_15, %c0_16] : memref<1x256xf32, #tpu.memory_space<vmem>>, vector<1x256xf32>
    %20 = vector.broadcast %19 : vector<1x256xf32> to vector<16x256xf32>
    %21 = arith.addf %18, %20 : vector<16x256xf32>
    %cst_17 = arith.constant 0.000000e+00 : f32
    %22 = vector.broadcast %cst_17 : f32 to vector<16x256xf32>
    %23 = arith.maximumf %21, %22 : vector<16x256xf32>
    %24 = arith.truncf %23 : vector<16x256xf32> to vector<16x256xbf16>
    %c0_18 = arith.constant 0 : index
    %c0_19 = arith.constant 0 : index
    %25 = vector.load %arg8[%c0_18, %c0_19] : memref<256x128xbf16, #tpu.memory_space<vmem>>, vector<256x128xbf16>
    %cst_20 = arith.constant dense<0.000000e+00> : vector<16x128xf32>
    %26 = tpu.matmul %24, %25, %cst_20 {dimension_numbers = #tpu.dot_dimension_numbers<[1], [0], [0], [1], [0, 0, 1, 1], [], []>} : vector<16x256xbf16>, vector<256x128xbf16>, vector<16x128xf32> -> vector<16x128xf32>
    %c0_21 = arith.constant 0 : index
    %c0_22 = arith.constant 0 : index
    %27 = vector.load %arg9[%c0_21, %c0_22] : memref<1x128xf32, #tpu.memory_space<vmem>>, vector<1x128xf32>
    %28 = vector.broadcast %27 : vector<1x128xf32> to vector<16x128xf32>
    %29 = arith.addf %26, %28 : vector<16x128xf32>
    %30 = tpu.iota {dimensions = array<i32: 1>} : vector<16x128xi32>
    %c4_i32 = arith.constant 4 : i32
    %31 = vector.broadcast %c4_i32 : i32 to vector<16x128xi32>
    %32 = arith.cmpi sge, %30, %31 : vector<16x128xi32>
    %c8_i32 = arith.constant 8 : i32
    %33 = vector.broadcast %c8_i32 : i32 to vector<16x128xi32>
    %34 = arith.cmpi slt, %30, %33 : vector<16x128xi32>
    %35 = arith.andi %32, %34 : vector<16x128xi1>
    %cst_23 = arith.constant 0.000000e+00 : f32
    %36 = vector.broadcast %cst_23 : f32 to vector<16x128xf32>
    %37 = arith.maximumf %29, %36 : vector<16x128xf32>
    %38 = math.absf %29 : vector<16x128xf32>
    %cst_24 = arith.constant 0.000000e+00 : f32
    %39 = vector.broadcast %cst_24 : f32 to vector<16x128xf32>
    %40 = arith.subf %39, %38 : vector<16x128xf32>
    %41 = math.exp %40 : vector<16x128xf32>
    %42 = math.log1p %41 : vector<16x128xf32>
    %43 = arith.addf %37, %42 : vector<16x128xf32>
    %cst_25 = arith.constant 9.99999993E-9 : f32
    %44 = vector.broadcast %cst_25 : f32 to vector<16x128xf32>
    %45 = arith.addf %43, %44 : vector<16x128xf32>
    %46 = arith.select %35, %45, %29 : vector<16x128xi1>, vector<16x128xf32>
    %c0_26 = arith.constant 0 : index
    %c0_27 = arith.constant 0 : index
    %47 = vector.load %arg10[%c0_26, %c0_27] : memref<16x128xf32, #tpu.memory_space<vmem>>, vector<16x128xf32>
    tpu.vector_store %arg10[%c0_26, %c0_27], %46 {strides = array<i32>} : memref<16x128xf32, #tpu.memory_space<vmem>>, vector<16x128xf32>,
    return
  }
  func.func @transform_0(%arg0: i32) -> (i32, i32) {
    %c0_i32 = arith.constant 0 : i32
    %c0_i32_0 = arith.constant 0 : i32
    return %arg0, %c0_i32 : i32, i32
  }
  func.func @transform_1(%arg0: i32) -> (i32, i32) {
    %c0_i32 = arith.constant 0 : i32
    %c0_i32_0 = arith.constant 0 : i32
    %c0_i32_1 = arith.constant 0 : i32
    return %c0_i32, %c0_i32_0 : i32, i32
  }
  func.func @transform_2(%arg0: i32) -> (i32, i32) {
    %c0_i32 = arith.constant 0 : i32
    %c0_i32_0 = arith.constant 0 : i32
    %c0_i32_1 = arith.constant 0 : i32
    return %c0_i32, %c0_i32_0 : i32, i32
  }
  func.func @transform_3(%arg0: i32) -> (i32, i32) {
    %c0_i32 = arith.constant 0 : i32
    %c0_i32_0 = arith.constant 0 : i32
    %c0_i32_1 = arith.constant 0 : i32
    return %c0_i32, %c0_i32_0 : i32, i32
  }
  func.func @transform_4(%arg0: i32) -> (i32, i32) {
    %c0_i32 = arith.constant 0 : i32
    %c0_i32_0 = arith.constant 0 : i32
    %c0_i32_1 = arith.constant 0 : i32
    return %c0_i32, %c0_i32_0 : i32, i32
  }
  func.func @transform_5(%arg0: i32) -> (i32, i32) {
    %c0_i32 = arith.constant 0 : i32
    %c0_i32_0 = arith.constant 0 : i32
    %c0_i32_1 = arith.constant 0 : i32
    return %c0_i32, %c0_i32_0 : i32, i32
  }
  func.func @transform_6(%arg0: i32) -> (i32, i32) {
    %c0_i32 = arith.constant 0 : i32
    %c0_i32_0 = arith.constant 0 : i32
    %c0_i32_1 = arith.constant 0 : i32
    return %c0_i32, %c0_i32_0 : i32, i32
  }
  func.func @transform_7(%arg0: i32) -> (i32, i32) {
    %c0_i32 = arith.constant 0 : i32
    %c0_i32_0 = arith.constant 0 : i32
    %c0_i32_1 = arith.constant 0 : i32
    return %c0_i32, %c0_i32_0 : i32, i32
  }
  func.func @transform_8(%arg0: i32) -> (i32, i32) {
    %c0_i32 = arith.constant 0 : i32
    %c0_i32_0 = arith.constant 0 : i32
    %c0_i32_1 = arith.constant 0 : i32
    return %c0_i32, %c0_i32_0 : i32, i32
  }
  func.func @transform_9(%arg0: i32) -> (i32, i32) {
    %c0_i32 = arith.constant 0 : i32
    %c0_i32_0 = arith.constant 0 : i32
    return %arg0, %c0_i32 : i32, i32
  }
}

</mosaic_0001>

<llo_original>
// kernel: gaussian_regressor_split_forward.1
$region0: #{gaussian_regressor_split_forward.1}
  #allocation0 [shape = 'u32[]', space=smem, size = 0x4, offset = 0x4, fixed_abs, tag = 'smem constant byte address 0x4 - core index']
  #allocation1 [shape = 'u32[144,128]{1,0:T(1,128)}', space=vmem, size = 0x12000, scoped, tag = 'internal scratch']
  %s0 = inlined_call_operand.vmem [shape: bf16[16,128], index: 0, kind: input, shape index: {}]
  %s1 = inlined_call_operand.vmem [shape: bf16[128,256], index: 1, kind: input, shape index: {}]
  %s2 = inlined_call_operand.vmem [shape: f32[1,256], index: 2, kind: input, shape index: {}]
  %s3 = inlined_call_operand.vmem [shape: bf16[256,256], index: 3, kind: input, shape index: {}]
  %s4 = inlined_call_operand.vmem [shape: f32[1,256], index: 4, kind: input, shape index: {}]
  %s5 = inlined_call_operand.vmem [shape: bf16[256,256], index: 5, kind: input, shape index: {}]
  %s6 = inlined_call_operand.vmem [shape: f32[1,256], index: 6, kind: input, shape index: {}]
  %s7 = inlined_call_operand.vmem [shape: bf16[256,128], index: 7, kind: input, shape index: {}]
  %s8 = inlined_call_operand.vmem [shape: f32[1,128], index: 8, kind: input, shape index: {}]
  %s9 = inlined_call_operand.vmem [shape: f32[16,128], index: 9, kind: output, shape index: {}]
  %s10 = sld [smem:[#allocation0]]
  $region46: #{gaussian_regressor_split_forward.1} parent=0
    _
  %s12 = ssub.s32 1, %s10
  %s13 = scalar_select 0, %s12, %s10
  // Predicated region
  $region2: #{gaussian_regressor_split_forward.1} parent=0 // pred_check
    _
  $region3: #{gaussian_regressor_split_forward.1} parent=0 // pred_check_branch
    %15 = sbr.rel (0) target = $region5
  $region4: #{gaussian_regressor_split_forward.1} parent=0 // pred_region
    _
  $region5: #{gaussian_regressor_split_forward.1} parent=0 // pred_fallthru
    _
  // Predicated region
  $region6: #{gaussian_regressor_split_forward.1} parent=0 // pred_check
    _
  $region7: #{gaussian_regressor_split_forward.1} parent=0 // pred_check_branch
    %17 = sbr.rel (0) target = $region9
  $region8: #{gaussian_regressor_split_forward.1} parent=0 // pred_region
    _
  $region9: #{gaussian_regressor_split_forward.1} parent=0 // pred_fallthru
    _
  // Predicated region
  $region10: #{gaussian_regressor_split_forward.1} parent=0 // pred_check
    _
  $region11: #{gaussian_regressor_split_forward.1} parent=0 // pred_check_branch
    %19 = sbr.rel (0) target = $region13
  $region12: #{gaussian_regressor_split_forward.1} parent=0 // pred_region
    _
  $region13: #{gaussian_regressor_split_forward.1} parent=0 // pred_fallthru
    _
  // Predicated region
  $region14: #{gaussian_regressor_split_forward.1} parent=0 // pred_check
    _
  $region15: #{gaussian_regressor_split_forward.1} parent=0 // pred_check_branch
    %21 = sbr.rel (0) target = $region17
  $region16: #{gaussian_regressor_split_forward.1} parent=0 // pred_region
    _
  $region17: #{gaussian_regressor_split_forward.1} parent=0 // pred_fallthru
    _
  // Predicated region
  $region18: #{gaussian_regressor_split_forward.1} parent=0 // pred_check
    _
  $region19: #{gaussian_regressor_split_forward.1} parent=0 // pred_check_branch
    %23 = sbr.rel (0) target = $region21
  $region20: #{gaussian_regressor_split_forward.1} parent=0 // pred_region
    _
  $region21: #{gaussian_regressor_split_forward.1} parent=0 // pred_fallthru
    _
  // Predicated region
  $region22: #{gaussian_regressor_split_forward.1} parent=0 // pred_check
    _
  $region23: #{gaussian_regressor_split_forward.1} parent=0 // pred_check_branch
    %25 = sbr.rel (0) target = $region25
  $region24: #{gaussian_regressor_split_forward.1} parent=0 // pred_region
    _
  $region25: #{gaussian_regressor_split_forward.1} parent=0 // pred_fallthru
    _
  // Predicated region
  $region26: #{gaussian_regressor_split_forward.1} parent=0 // pred_check
    _
  $region27: #{gaussian_regressor_split_forward.1} parent=0 // pred_check_branch
    %27 = sbr.rel (0) target = $region29
  $region28: #{gaussian_regressor_split_forward.1} parent=0 // pred_region
    _
  $region29: #{gaussian_regressor_split_forward.1} parent=0 // pred_fallthru
    _
  // Predicated region
  $region30: #{gaussian_regressor_split_forward.1} parent=0 // pred_check
    _
  $region31: #{gaussian_regressor_split_forward.1} parent=0 // pred_check_branch
    %29 = sbr.rel (0) target = $region33
  $region32: #{gaussian_regressor_split_forward.1} parent=0 // pred_region
    _
  $region33: #{gaussian_regressor_split_forward.1} parent=0 // pred_fallthru
    _
  // Predicated region
  $region34: #{gaussian_regressor_split_forward.1} parent=0 // pred_check
    _
  $region35: #{gaussian_regressor_split_forward.1} parent=0 // pred_check_branch
    %31 = sbr.rel (0) target = $region37
  $region36: #{gaussian_regressor_split_forward.1} parent=0 // pred_region
    _
  $region37: #{gaussian_regressor_split_forward.1} parent=0 // pred_fallthru
    _
  %v33 = vld [vmem:[%s0] sm:$0xf]
  %v34 = vld [vmem:[%s0 + $0x4] sm:$0xf]
  %v35 = vld [vmem:[%s1] sm:$0xff]
  %v36 = vld [vmem:[%s1 + $0x8] sm:$0xff]
  %v37 = vld [vmem:[%s1 + $0x10] sm:$0xff]
  %v38 = vld [vmem:[%s1 + $0x18] sm:$0xff]
  %v39 = vld [vmem:[%s1 + $0x20] sm:$0xff]
  %v40 = vld [vmem:[%s1 + $0x28] sm:$0xff]
  %v41 = vld [vmem:[%s1 + $0x30] sm:$0xff]
  %v42 = vld [vmem:[%s1 + $0x38] sm:$0xff]
  %v43 = vld [vmem:[%s1 + $0x40] sm:$0xff]
  %v44 = vld [vmem:[%s1 + $0x48] sm:$0xff]
  %v45 = vld [vmem:[%s1 + $0x50] sm:$0xff]
  %v46 = vld [vmem:[%s1 + $0x58] sm:$0xff]
  %v47 = vld [vmem:[%s1 + $0x60] sm:$0xff]
  %v48 = vld [vmem:[%s1 + $0x68] sm:$0xff]
  %v49 = vld [vmem:[%s1 + $0x70] sm:$0xff]
  %v50 = vld [vmem:[%s1 + $0x78] sm:$0xff]
  %v51 = vld [vmem:[%s2] sm:$0x3]
  %v53 = vlaneseq
  %v54 = vshrl.u32 %v53, 7
  %v55 = vsub.s32 0, %v54
  %v56 = vrot.slane %v51, %v55
  %v57 = vlaneseq
  %v58 = vshrl.u32 %v57, 7
  %v59 = vsub.s32 1, %v58
  %v60 = vrot.slane %v51, %v59
  %v65 = vunpack.c.l.b16 %v33
  %v66 = vunpack.c.l.b16 %v34
  %v67 = vpack.c.b16 %v66, %v65
  %v85 = vunpack.c.l.b16 %v35
  %v86 = vunpack.c.h.b16 %v35
  %v87 = vunpack.c.l.b16 %v36
  %v88 = vunpack.c.h.b16 %v36
  %v89 = vunpack.c.l.b16 %v37
  %v90 = vunpack.c.h.b16 %v37
  %v91 = vunpack.c.l.b16 %v38
  %v92 = vunpack.c.h.b16 %v38
  %v93 = vunpack.c.l.b16 %v39
  %v94 = vunpack.c.h.b16 %v39
  %v95 = vunpack.c.l.b16 %v40
  %v96 = vunpack.c.h.b16 %v40
  %v97 = vunpack.c.l.b16 %v41
  %v98 = vunpack.c.h.b16 %v41
  %v99 = vunpack.c.l.b16 %v42
  %v100 = vunpack.c.h.b16 %v42
  %v101 = vunpack.c.l.b16 %v43
  %v102 = vunpack.c.h.b16 %v43
  %v103 = vunpack.c.l.b16 %v44
  %v104 = vunpack.c.h.b16 %v44
  %v105 = vunpack.c.l.b16 %v45
  %v106 = vunpack.c.h.b16 %v45
  %v107 = vunpack.c.l.b16 %v46
  %v108 = vunpack.c.h.b16 %v46
  %v109 = vunpack.c.l.b16 %v47
  %v110 = vunpack.c.h.b16 %v47
  %v111 = vunpack.c.l.b16 %v48
  %v112 = vunpack.c.h.b16 %v48
  %v113 = vunpack.c.l.b16 %v49
  %v114 = vunpack.c.h.b16 %v49
  %v115 = vunpack.c.l.b16 %v50
  %v116 = vunpack.c.h.b16 %v50
  %v117 = vpack.c.b16 %v87, %v85
  %v118 = vpack.c.b16 %v88, %v86
  %v119 = vpack.c.b16 %v91, %v89
  %v120 = vpack.c.b16 %v92, %v90
  %v121 = vpack.c.b16 %v95, %v93
  %v122 = vpack.c.b16 %v96, %v94
  %v123 = vpack.c.b16 %v99, %v97
  %v124 = vpack.c.b16 %v100, %v98
  %v125 = vpack.c.b16 %v103, %v101
  %v126 = vpack.c.b16 %v104, %v102
  %v127 = vpack.c.b16 %v107, %v105
  %v128 = vpack.c.b16 %v108, %v106
  %v129 = vpack.c.b16 %v111, %v109
  %v130 = vpack.c.b16 %v112, %v110
  %v131 = vpack.c.b16 %v115, %v113
  %v132 = vpack.c.b16 %v116, %v114
  %149 = vmatprep.subr.bf16.mxu0 %v118
  %150 = vmatpush1.bf16.msra.mxu0 %v117
  %151 = vmatprep.subr.bf16.mxu0 %v120
  %152 = vmatpush1.bf16.msra.mxu0 %v119
  %153 = vmatprep.subr.bf16.mxu0 %v122
  %154 = vmatpush1.bf16.msra.mxu0 %v121
  %155 = vmatprep.subr.bf16.mxu0 %v124
  %156 = vmatpush1.bf16.msra.mxu0 %v123
  %157 = vmatprep.subr.bf16.mxu0 %v126
  %158 = vmatpush1.bf16.msra.mxu0 %v125
  %159 = vmatprep.subr.bf16.mxu0 %v128
  %160 = vmatpush1.bf16.msra.mxu0 %v127
  %161 = vmatprep.subr.bf16.mxu0 %v130
  %162 = vmatpush1.bf16.msra.mxu0 %v129
  %163 = vmatprep.subr.bf16.mxu0 %v132
  %164 = vmatpush1.bf16.msra.mxu0 %v131
  %165 = vmatprep.subr.bf16.mxu0 0
  %166 = vmatpush1.bf16.msra.mxu0 0
  %167 = vmatprep.subr.bf16.mxu0 0
  %168 = vmatpush1.bf16.msra.mxu0 0
  %169 = vmatprep.subr.bf16.mxu0 0
  %170 = vmatpush1.bf16.msra.mxu0 0
  %171 = vmatprep.subr.bf16.mxu0 0
  %172 = vmatpush1.bf16.msra.mxu0 0
  %173 = vmatprep.subr.bf16.mxu0 0
  %174 = vmatpush1.bf16.msra.mxu0 0
  %175 = vmatprep.subr.bf16.mxu0 0
  %176 = vmatpush1.bf16.msra.mxu0 0
  %177 = vmatprep.subr.bf16.mxu0 0
  %178 = vmatpush1.bf16.msra.mxu0 0
  %179 = vmatprep.subr.bf16.mxu0 0
  %180 = vmatpush1.bf16.msra.mxu0 0
  %181 = vmatprep.mubr.bf16.mxu0 0
  %182 = vmatmul.mubr.bf16.gmra.mrb[0].mxu0 %v67
  %v183 = vpop.f32.mrb[0].mxu0
  %v184 = vadd.f32 %v56, %v183
  %v185 = vpop.f32.mrb[0].mxu0
  %v186 = vadd.f32 %v60, %v185
  %v187 = vpop.f32.mrb[0].mxu0
  %v188 = vadd.f32 %v56, %v187
  %v189 = vpop.f32.mrb[0].mxu0
  %v190 = vadd.f32 %v60, %v189
  %191 = vdwg.mxu0
  %v192 = vmax.f32 %v184, 0.0
  %v193 = vmax.f32 %v186, 0.0
  %v194 = vmax.f32 %v188, 0.0
  %v195 = vmax.f32 %v190, 0.0
  %v196 = vpack.c.bf16 %v194, %v192
  %v197 = vpack.c.bf16 %v195, %v193
  %v198 = vld [vmem:[%s3] sm:$0xff]
  %v199 = vld [vmem:[%s3 + $0x8] sm:$0xff]
  %v200 = vld [vmem:[%s3 + $0x10] sm:$0xff]
  %v201 = vld [vmem:[%s3 + $0x18] sm:$0xff]
  %v202 = vld [vmem:[%s3 + $0x20] sm:$0xff]
  %v203 = vld [vmem:[%s3 + $0x28] sm:$0xff]
  %v204 = vld [vmem:[%s3 + $0x30] sm:$0xff]
  %v205 = vld [vmem:[%s3 + $0x38] sm:$0xff]
  %v206 = vld [vmem:[%s3 + $0x40] sm:$0xff]
  %v207 = vld [vmem:[%s3 + $0x48] sm:$0xff]
  %v208 = vld [vmem:[%s3 + $0x50] sm:$0xff]
  %v209 = vld [vmem:[%s3 + $0x58] sm:$0xff]
  %v210 = vld [vmem:[%s3 + $0x60] sm:$0xff]
  %v211 = vld [vmem:[%s3 + $0x68] sm:$0xff]
  %v212 = vld [vmem:[%s3 + $0x70] sm:$0xff]
  %v213 = vld [vmem:[%s3 + $0x78] sm:$0xff]
  %v214 = vld [vmem:[%s3 + $0x80] sm:$0xff]
  %v215 = vld [vmem:[%s3 + $0x88] sm:$0xff]
  %v216 = vld [vmem:[%s3 + $0x90] sm:$0xff]
  %v217 = vld [vmem:[%s3 + $0x98] sm:$0xff]
  %v218 = vld [vmem:[%s3 + $0xa0] sm:$0xff]
  %v219 = vld [vmem:[%s3 + $0xa8] sm:$0xff]
  %v220 = vld [vmem:[%s3 + $0xb0] sm:$0xff]
  %v221 = vld [vmem:[%s3 + $0xb8] sm:$0xff]
  %v222 = vld [vmem:[%s3 + $0xc0] sm:$0xff]
  %v223 = vld [vmem:[%s3 + $0xc8] sm:$0xff]
  %v224 = vld [vmem:[%s3 + $0xd0] sm:$0xff]
  %v225 = vld [vmem:[%s3 + $0xd8] sm:$0xff]
  %v226 = vld [vmem:[%s3 + $0xe0] sm:$0xff]
  %v227 = vld [vmem:[%s3 + $0xe8] sm:$0xff]
  %v228 = vld [vmem:[%s3 + $0xf0] sm:$0xff]
  %v229 = vld [vmem:[%s3 + $0xf8] sm:$0xff]
  %v230 = vld [vmem:[%s4] sm:$0x3]
  %v232 = vlaneseq
  %v233 = vshrl.u32 %v232, 7
  %v234 = vsub.s32 0, %v233
  %v235 = vrot.slane %v230, %v234
  %v236 = vlaneseq
  %v237 = vshrl.u32 %v236, 7
  %v238 = vsub.s32 1, %v237
  %v239 = vrot.slane %v230, %v238
  %v274 = vunpack.c.l.b16 %v198
  %v275 = vunpack.c.h.b16 %v198
  %v276 = vunpack.c.l.b16 %v199
  %v277 = vunpack.c.h.b16 %v199
  %v278 = vunpack.c.l.b16 %v200
  %v279 = vunpack.c.h.b16 %v200
  %v280 = vunpack.c.l.b16 %v201
  %v281 = vunpack.c.h.b16 %v201
  %v282 = vunpack.c.l.b16 %v202
  %v283 = vunpack.c.h.b16 %v202
  %v284 = vunpack.c.l.b16 %v203
  %v285 = vunpack.c.h.b16 %v203
  %v286 = vunpack.c.l.b16 %v204
  %v287 = vunpack.c.h.b16 %v204
  %v288 = vunpack.c.l.b16 %v205
  %v289 = vunpack.c.h.b16 %v205
  %v290 = vunpack.c.l.b16 %v206
  %v291 = vunpack.c.h.b16 %v206
  %v292 = vunpack.c.l.b16 %v207
  %v293 = vunpack.c.h.b16 %v207
  %v294 = vunpack.c.l.b16 %v208
  %v295 = vunpack.c.h.b16 %v208
  %v296 = vunpack.c.l.b16 %v209
  %v297 = vunpack.c.h.b16 %v209
  %v298 = vunpack.c.l.b16 %v210
  %v299 = vunpack.c.h.b16 %v210
  %v300 = vunpack.c.l.b16 %v211
  %v301 = vunpack.c.h.b16 %v211
  %v302 = vunpack.c.l.b16 %v212
  %v303 = vunpack.c.h.b16 %v212
  %v304 = vunpack.c.l.b16 %v213
  %v305 = vunpack.c.h.b16 %v213
  %v306 = vunpack.c.l.b16 %v214
  %v307 = vunpack.c.h.b16 %v214
  %v308 = vunpack.c.l.b16 %v215
  %v309 = vunpack.c.h.b16 %v215
  %v310 = vunpack.c.l.b16 %v216
  %v311 = vunpack.c.h.b16 %v216
  %v312 = vunpack.c.l.b16 %v217
  %v313 = vunpack.c.h.b16 %v217
  %v314 = vunpack.c.l.b16 %v218
  %v315 = vunpack.c.h.b16 %v218
  %v316 = vunpack.c.l.b16 %v219
  %v317 = vunpack.c.h.b16 %v219
  %v318 = vunpack.c.l.b16 %v220
  %v319 = vunpack.c.h.b16 %v220
  %v320 = vunpack.c.l.b16 %v221
  %v321 = vunpack.c.h.b16 %v221
  %v322 = vunpack.c.l.b16 %v222
  %v323 = vunpack.c.h.b16 %v222
  %v324 = vunpack.c.l.b16 %v223
  %v325 = vunpack.c.h.b16 %v223
  %v326 = vunpack.c.l.b16 %v224
  %v327 = vunpack.c.h.b16 %v224
  %v328 = vunpack.c.l.b16 %v225
  %v329 = vunpack.c.h.b16 %v225
  %v330 = vunpack.c.l.b16 %v226
  %v331 = vunpack.c.h.b16 %v226
  %v332 = vunpack.c.l.b16 %v227
  %v333 = vunpack.c.h.b16 %v227
  %v334 = vunpack.c.l.b16 %v228
  %v335 = vunpack.c.h.b16 %v228
  %v336 = vunpack.c.l.b16 %v229
  %v337 = vunpack.c.h.b16 %v229
  %v338 = vpack.c.b16 %v276, %v274
  %v339 = vpack.c.b16 %v277, %v275
  %v340 = vpack.c.b16 %v280, %v278
  %v341 = vpack.c.b16 %v281, %v279
  %v342 = vpack.c.b16 %v284, %v282
  %v343 = vpack.c.b16 %v285, %v283
  %v344 = vpack.c.b16 %v288, %v286
  %v345 = vpack.c.b16 %v289, %v287
  %v346 = vpack.c.b16 %v292, %v290
  %v347 = vpack.c.b16 %v293, %v291
  %v348 = vpack.c.b16 %v296, %v294
  %v349 = vpack.c.b16 %v297, %v295
  %v350 = vpack.c.b16 %v300, %v298
  %v351 = vpack.c.b16 %v301, %v299
  %v352 = vpack.c.b16 %v304, %v302
  %v353 = vpack.c.b16 %v305, %v303
  %v354 = vpack.c.b16 %v308, %v306
  %v355 = vpack.c.b16 %v309, %v307
  %v356 = vpack.c.b16 %v312, %v310
  %v357 = vpack.c.b16 %v313, %v311
  %v358 = vpack.c.b16 %v316, %v314
  %v359 = vpack.c.b16 %v317, %v315
  %v360 = vpack.c.b16 %v320, %v318
  %v361 = vpack.c.b16 %v321, %v319
  %v362 = vpack.c.b16 %v324, %v322
  %v363 = vpack.c.b16 %v325, %v323
  %v364 = vpack.c.b16 %v328, %v326
  %v365 = vpack.c.b16 %v329, %v327
  %v366 = vpack.c.b16 %v332, %v330
  %v367 = vpack.c.b16 %v333, %v331
  %v368 = vpack.c.b16 %v336, %v334
  %v369 = vpack.c.b16 %v337, %v335
  %402 = vmatprep.subr.bf16.mxu0 %v339
  %403 = vmatpush1.bf16.msra.mxu0 %v338
  %404 = vmatprep.subr.bf16.mxu0 %v341
  %405 = vmatpush1.bf16.msra.mxu0 %v340
  %406 = vmatprep.subr.bf16.mxu0 %v343
  %407 = vmatpush1.bf16.msra.mxu0 %v342
  %408 = vmatprep.subr.bf16.mxu0 %v345
  %409 = vmatpush1.bf16.msra.mxu0 %v344
  %410 = vmatprep.subr.bf16.mxu0 %v347
  %411 = vmatpush1.bf16.msra.mxu0 %v346
  %412 = vmatprep.subr.bf16.mxu0 %v349
  %413 = vmatpush1.bf16.msra.mxu0 %v348
  %414 = vmatprep.subr.bf16.mxu0 %v351
  %415 = vmatpush1.bf16.msra.mxu0 %v350
  %416 = vmatprep.subr.bf16.mxu0 %v353
  %417 = vmatpush1.bf16.msra.mxu0 %v352
  %418 = vmatprep.subr.bf16.mxu0 %v355
  %419 = vmatpush1.bf16.msra.mxu0 %v354
  %420 = vmatprep.subr.bf16.mxu0 %v357
  %421 = vmatpush1.bf16.msra.mxu0 %v356
  %422 = vmatprep.subr.bf16.mxu0 %v359
  %423 = vmatpush1.bf16.msra.mxu0 %v358
  %424 = vmatprep.subr.bf16.mxu0 %v361
  %425 = vmatpush1.bf16.msra.mxu0 %v360
  %426 = vmatprep.subr.bf16.mxu0 %v363
  %427 = vmatpush1.bf16.msra.mxu0 %v362
  %428 = vmatprep.subr.bf16.mxu0 %v365
  %429 = vmatpush1.bf16.msra.mxu0 %v364
  %430 = vmatprep.subr.bf16.mxu0 %v367
  %431 = vmatpush1.bf16.msra.mxu0 %v366
  %432 = vmatprep.subr.bf16.mxu0 %v369
  %433 = vmatpush1.bf16.msra.mxu0 %v368
  %434 = vmatprep.mubr.bf16.mxu0 %v197
  %435 = vmatmul.mubr.bf16.gmra.mrb[0].mxu0 %v196
  %v436 = vpop.f32.mrb[0].mxu0
  %v437 = vadd.f32 %v235, %v436
  %v438 = vpop.f32.mrb[0].mxu0
  %v439 = vadd.f32 %v239, %v438
  %v440 = vpop.f32.mrb[0].mxu0
  %v441 = vadd.f32 %v235, %v440
  %v442 = vpop.f32.mrb[0].mxu0
  %v443 = vadd.f32 %v239, %v442
  %444 = vdwg.mxu0
  %v445 = vmax.f32 %v437, 0.0
  %v446 = vmax.f32 %v439, 0.0
  %v447 = vmax.f32 %v441, 0.0
  %v448 = vmax.f32 %v443, 0.0
  %v449 = vpack.c.bf16 %v447, %v445
  %v450 = vpack.c.bf16 %v448, %v446
  %v451 = vld [vmem:[%s5] sm:$0xff]
  %v452 = vld [vmem:[%s5 + $0x8] sm:$0xff]
  %v453 = vld [vmem:[%s5 + $0x10] sm:$0xff]
  %v454 = vld [vmem:[%s5 + $0x18] sm:$0xff]
  %v455 = vld [vmem:[%s5 + $0x20] sm:$0xff]
  %v456 = vld [vmem:[%s5 + $0x28] sm:$0xff]
  %v457 = vld [vmem:[%s5 + $0x30] sm:$0xff]
  %v458 = vld [vmem:[%s5 + $0x38] sm:$0xff]
  %v459 = vld [vmem:[%s5 + $0x40] sm:$0xff]
  %v460 = vld [vmem:[%s5 + $0x48] sm:$0xff]
  %v461 = vld [vmem:[%s5 + $0x50] sm:$0xff]
  %v462 = vld [vmem:[%s5 + $0x58] sm:$0xff]
  %v463 = vld [vmem:[%s5 + $0x60] sm:$0xff]
  %v464 = vld [vmem:[%s5 + $0x68] sm:$0xff]
  %v465 = vld [vmem:[%s5 + $0x70] sm:$0xff]
  %v466 = vld [vmem:[%s5 + $0x78] sm:$0xff]
  %v467 = vld [vmem:[%s5 + $0x80] sm:$0xff]
  %v468 = vld [vmem:[%s5 + $0x88] sm:$0xff]
  %v469 = vld [vmem:[%s5 + $0x90] sm:$0xff]
  %v470 = vld [vmem:[%s5 + $0x98] sm:$0xff]
  %v471 = vld [vmem:[%s5 + $0xa0] sm:$0xff]
  %v472 = vld [vmem:[%s5 + $0xa8] sm:$0xff]
  %v473 = vld [vmem:[%s5 + $0xb0] sm:$0xff]
  %v474 = vld [vmem:[%s5 + $0xb8] sm:$0xff]
  %v475 = vld [vmem:[%s5 + $0xc0] sm:$0xff]
  %v476 = vld [vmem:[%s5 + $0xc8] sm:$0xff]
  %v477 = vld [vmem:[%s5 + $0xd0] sm:$0xff]
  %v478 = vld [vmem:[%s5 + $0xd8] sm:$0xff]
  %v479 = vld [vmem:[%s5 + $0xe0] sm:$0xff]
  %v480 = vld [vmem:[%s5 + $0xe8] sm:$0xff]
  %v481 = vld [vmem:[%s5 + $0xf0] sm:$0xff]
  %v482 = vld [vmem:[%s5 + $0xf8] sm:$0xff]
  %v483 = vld [vmem:[%s6] sm:$0x3]
  %v485 = vlaneseq
  %v486 = vshrl.u32 %v485, 7
  %v487 = vsub.s32 0, %v486
  %v488 = vrot.slane %v483, %v487
  %v489 = vlaneseq
  %v490 = vshrl.u32 %v489, 7
  %v491 = vsub.s32 1, %v490
  %v492 = vrot.slane %v483, %v491
  %v527 = vunpack.c.l.b16 %v451
  %v528 = vunpack.c.h.b16 %v451
  %v529 = vunpack.c.l.b16 %v452
  %v530 = vunpack.c.h.b16 %v452
  %v531 = vunpack.c.l.b16 %v453
  %v532 = vunpack.c.h.b16 %v453
  %v533 = vunpack.c.l.b16 %v454
  %v534 = vunpack.c.h.b16 %v454
  %v535 = vunpack.c.l.b16 %v455
  %v536 = vunpack.c.h.b16 %v455
  %v537 = vunpack.c.l.b16 %v456
  %v538 = vunpack.c.h.b16 %v456
  %v539 = vunpack.c.l.b16 %v457
  %v540 = vunpack.c.h.b16 %v457
  %v541 = vunpack.c.l.b16 %v458
  %v542 = vunpack.c.h.b16 %v458
  %v543 = vunpack.c.l.b16 %v459
  %v544 = vunpack.c.h.b16 %v459
  %v545 = vunpack.c.l.b16 %v460
  %v546 = vunpack.c.h.b16 %v460
  %v547 = vunpack.c.l.b16 %v461
  %v548 = vunpack.c.h.b16 %v461
  %v549 = vunpack.c.l.b16 %v462
  %v550 = vunpack.c.h.b16 %v462
  %v551 = vunpack.c.l.b16 %v463
  %v552 = vunpack.c.h.b16 %v463
  %v553 = vunpack.c.l.b16 %v464
  %v554 = vunpack.c.h.b16 %v464
  %v555 = vunpack.c.l.b16 %v465
  %v556 = vunpack.c.h.b16 %v465
  %v557 = vunpack.c.l.b16 %v466
  %v558 = vunpack.c.h.b16 %v466
  %v559 = vunpack.c.l.b16 %v467
  %v560 = vunpack.c.h.b16 %v467
  %v561 = vunpack.c.l.b16 %v468
  %v562 = vunpack.c.h.b16 %v468
  %v563 = vunpack.c.l.b16 %v469
  %v564 = vunpack.c.h.b16 %v469
  %v565 = vunpack.c.l.b16 %v470
  %v566 = vunpack.c.h.b16 %v470
  %v567 = vunpack.c.l.b16 %v471
  %v568 = vunpack.c.h.b16 %v471
  %v569 = vunpack.c.l.b16 %v472
  %v570 = vunpack.c.h.b16 %v472
  %v571 = vunpack.c.l.b16 %v473
  %v572 = vunpack.c.h.b16 %v473
  %v573 = vunpack.c.l.b16 %v474
  %v574 = vunpack.c.h.b16 %v474
  %v575 = vunpack.c.l.b16 %v475
  %v576 = vunpack.c.h.b16 %v475
  %v577 = vunpack.c.l.b16 %v476
  %v578 = vunpack.c.h.b16 %v476
  %v579 = vunpack.c.l.b16 %v477
  %v580 = vunpack.c.h.b16 %v477
  %v581 = vunpack.c.l.b16 %v478
  %v582 = vunpack.c.h.b16 %v478
  %v583 = vunpack.c.l.b16 %v479
  %v584 = vunpack.c.h.b16 %v479
  %v585 = vunpack.c.l.b16 %v480
  %v586 = vunpack.c.h.b16 %v480
  %v587 = vunpack.c.l.b16 %v481
  %v588 = vunpack.c.h.b16 %v481
  %v589 = vunpack.c.l.b16 %v482
  %v590 = vunpack.c.h.b16 %v482
  %v591 = vpack.c.b16 %v529, %v527
  %v592 = vpack.c.b16 %v530, %v528
  %v593 = vpack.c.b16 %v533, %v531
  %v594 = vpack.c.b16 %v534, %v532
  %v595 = vpack.c.b16 %v537, %v535
  %v596 = vpack.c.b16 %v538, %v536
  %v597 = vpack.c.b16 %v541, %v539
  %v598 = vpack.c.b16 %v542, %v540
  %v599 = vpack.c.b16 %v545, %v543
  %v600 = vpack.c.b16 %v546, %v544
  %v601 = vpack.c.b16 %v549, %v547
  %v602 = vpack.c.b16 %v550, %v548
  %v603 = vpack.c.b16 %v553, %v551
  %v604 = vpack.c.b16 %v554, %v552
  %v605 = vpack.c.b16 %v557, %v555
  %v606 = vpack.c.b16 %v558, %v556
  %v607 = vpack.c.b16 %v561, %v559
  %v608 = vpack.c.b16 %v562, %v560
  %v609 = vpack.c.b16 %v565, %v563
  %v610 = vpack.c.b16 %v566, %v564
  %v611 = vpack.c.b16 %v569, %v567
  %v612 = vpack.c.b16 %v570, %v568
  %v613 = vpack.c.b16 %v573, %v571
  %v614 = vpack.c.b16 %v574, %v572
  %v615 = vpack.c.b16 %v577, %v575
  %v616 = vpack.c.b16 %v578, %v576
  %v617 = vpack.c.b16 %v581, %v579
  %v618 = vpack.c.b16 %v582, %v580
  %v619 = vpack.c.b16 %v585, %v583
  %v620 = vpack.c.b16 %v586, %v584
  %v621 = vpack.c.b16 %v589, %v587
  %v622 = vpack.c.b16 %v590, %v588
  %655 = vmatprep.subr.bf16.mxu0 %v592
  %656 = vmatpush1.bf16.msra.mxu0 %v591
  %657 = vmatprep.subr.bf16.mxu0 %v594
  %658 = vmatpush1.bf16.msra.mxu0 %v593
  %659 = vmatprep.subr.bf16.mxu0 %v596
  %660 = vmatpush1.bf16.msra.mxu0 %v595
  %661 = vmatprep.subr.bf16.mxu0 %v598
  %662 = vmatpush1.bf16.msra.mxu0 %v597
  %663 = vmatprep.subr.bf16.mxu0 %v600
  %664 = vmatpush1.bf16.msra.mxu0 %v599
  %665 = vmatprep.subr.bf16.mxu0 %v602
  %666 = vmatpush1.bf16.msra.mxu0 %v601
  %667 = vmatprep.subr.bf16.mxu0 %v604
  %668 = vmatpush1.bf16.msra.mxu0 %v603
  %669 = vmatprep.subr.bf16.mxu0 %v606
  %670 = vmatpush1.bf16.msra.mxu0 %v605
  %671 = vmatprep.subr.bf16.mxu0 %v608
  %672 = vmatpush1.bf16.msra.mxu0 %v607
  %673 = vmatprep.subr.bf16.mxu0 %v610
  %674 = vmatpush1.bf16.msra.mxu0 %v609
  %675 = vmatprep.subr.bf16.mxu0 %v612
  %676 = vmatpush1.bf16.msra.mxu0 %v611
  %677 = vmatprep.subr.bf16.mxu0 %v614
  %678 = vmatpush1.bf16.msra.mxu0 %v613
  %679 = vmatprep.subr.bf16.mxu0 %v616
  %680 = vmatpush1.bf16.msra.mxu0 %v615
  %681 = vmatprep.subr.bf16.mxu0 %v618
  %682 = vmatpush1.bf16.msra.mxu0 %v617
  %683 = vmatprep.subr.bf16.mxu0 %v620
  %684 = vmatpush1.bf16.msra.mxu0 %v619
  %685 = vmatprep.subr.bf16.mxu0 %v622
  %686 = vmatpush1.bf16.msra.mxu0 %v621
  %687 = vmatprep.mubr.bf16.mxu0 %v450
  %688 = vmatmul.mubr.bf16.gmra.mrb[0].mxu0 %v449
  %v689 = vpop.f32.mrb[0].mxu0
  %v690 = vadd.f32 %v488, %v689
  %v691 = vpop.f32.mrb[0].mxu0
  %v692 = vadd.f32 %v492, %v691
  %v693 = vpop.f32.mrb[0].mxu0
  %v694 = vadd.f32 %v488, %v693
  %v695 = vpop.f32.mrb[0].mxu0
  %v696 = vadd.f32 %v492, %v695
  %697 = vdwg.mxu0
  %v698 = vmax.f32 %v690, 0.0
  %v699 = vmax.f32 %v692, 0.0
  %v700 = vmax.f32 %v694, 0.0
  %v701 = vmax.f32 %v696, 0.0
  %v702 = vpack.c.bf16 %v700, %v698
  %v703 = vpack.c.bf16 %v701, %v699
  %v704 = vld [vmem:[%s7] sm:$0xf]
  %v705 = vld [vmem:[%s7 + $0x4] sm:$0xf]
  %v706 = vld [vmem:[%s7 + $0x8] sm:$0xf]
  %v707 = vld [vmem:[%s7 + $0xc] sm:$0xf]
  %v708 = vld [vmem:[%s7 + $0x10] sm:$0xf]
  %v709 = vld [vmem:[%s7 + $0x14] sm:$0xf]
  %v710 = vld [vmem:[%s7 + $0x18] sm:$0xf]
  %v711 = vld [vmem:[%s7 + $0x1c] sm:$0xf]
  %v712 = vld [vmem:[%s7 + $0x20] sm:$0xf]
  %v713 = vld [vmem:[%s7 + $0x24] sm:$0xf]
  %v714 = vld [vmem:[%s7 + $0x28] sm:$0xf]
  %v715 = vld [vmem:[%s7 + $0x2c] sm:$0xf]
  %v716 = vld [vmem:[%s7 + $0x30] sm:$0xf]
  %v717 = vld [vmem:[%s7 + $0x34] sm:$0xf]
  %v718 = vld [vmem:[%s7 + $0x38] sm:$0xf]
  %v719 = vld [vmem:[%s7 + $0x3c] sm:$0xf]
  %v720 = vld [vmem:[%s7 + $0x40] sm:$0xf]
  %v721 = vld [vmem:[%s7 + $0x44] sm:$0xf]
  %v722 = vld [vmem:[%s7 + $0x48] sm:$0xf]
  %v723 = vld [vmem:[%s7 + $0x4c] sm:$0xf]
  %v724 = vld [vmem:[%s7 + $0x50] sm:$0xf]
  %v725 = vld [vmem:[%s7 + $0x54] sm:$0xf]
  %v726 = vld [vmem:[%s7 + $0x58] sm:$0xf]
  %v727 = vld [vmem:[%s7 + $0x5c] sm:$0xf]
  %v728 = vld [vmem:[%s7 + $0x60] sm:$0xf]
  %v729 = vld [vmem:[%s7 + $0x64] sm:$0xf]
  %v730 = vld [vmem:[%s7 + $0x68] sm:$0xf]
  %v731 = vld [vmem:[%s7 + $0x6c] sm:$0xf]
  %v732 = vld [vmem:[%s7 + $0x70] sm:$0xf]
  %v733 = vld [vmem:[%s7 + $0x74] sm:$0xf]
  %v734 = vld [vmem:[%s7 + $0x78] sm:$0xf]
  %v735 = vld [vmem:[%s7 + $0x7c] sm:$0xf]
  %v736 = vld [vmem:[%s8] sm:$0x1]
  %v738 = vlaneseq
  %v739 = vshrl.u32 %v738, 7
  %v740 = vsub.s32 0, %v739
  %v741 = vrot.slane %v736, %v740
  %v775 = vunpack.c.l.b16 %v704
  %v776 = vunpack.c.l.b16 %v705
  %v777 = vunpack.c.l.b16 %v706
  %v778 = vunpack.c.l.b16 %v707
  %v779 = vunpack.c.l.b16 %v708
  %v780 = vunpack.c.l.b16 %v709
  %v781 = vunpack.c.l.b16 %v710
  %v782 = vunpack.c.l.b16 %v711
  %v783 = vunpack.c.l.b16 %v712
  %v784 = vunpack.c.l.b16 %v713
  %v785 = vunpack.c.l.b16 %v714
  %v786 = vunpack.c.l.b16 %v715
  %v787 = vunpack.c.l.b16 %v716
  %v788 = vunpack.c.l.b16 %v717
  %v789 = vunpack.c.l.b16 %v718
  %v790 = vunpack.c.l.b16 %v719
  %v791 = vunpack.c.l.b16 %v720
  %v792 = vunpack.c.l.b16 %v721
  %v793 = vunpack.c.l.b16 %v722
  %v794 = vunpack.c.l.b16 %v723
  %v795 = vunpack.c.l.b16 %v724
  %v796 = vunpack.c.l.b16 %v725
  %v797 = vunpack.c.l.b16 %v726
  %v798 = vunpack.c.l.b16 %v727
  %v799 = vunpack.c.l.b16 %v728
  %v800 = vunpack.c.l.b16 %v729
  %v801 = vunpack.c.l.b16 %v730
  %v802 = vunpack.c.l.b16 %v731
  %v803 = vunpack.c.l.b16 %v732
  %v804 = vunpack.c.l.b16 %v733
  %v805 = vunpack.c.l.b16 %v734
  %v806 = vunpack.c.l.b16 %v735
  %v807 = vpack.c.b16 %v776, %v775
  %v808 = vpack.c.b16 %v778, %v777
  %v809 = vpack.c.b16 %v780, %v779
  %v810 = vpack.c.b16 %v782, %v781
  %v811 = vpack.c.b16 %v784, %v783
  %v812 = vpack.c.b16 %v786, %v785
  %v813 = vpack.c.b16 %v788, %v787
  %v814 = vpack.c.b16 %v790, %v789
  %v815 = vpack.c.b16 %v792, %v791
  %v816 = vpack.c.b16 %v794, %v793
  %v817 = vpack.c.b16 %v796, %v795
  %v818 = vpack.c.b16 %v798, %v797
  %v819 = vpack.c.b16 %v800, %v799
  %v820 = vpack.c.b16 %v802, %v801
  %v821 = vpack.c.b16 %v804, %v803
  %v822 = vpack.c.b16 %v806, %v805
  %839 = vmatprep.subr.bf16.mxu0 0
  %840 = vmatpush1.bf16.msra.mxu0 %v807
  %841 = vmatprep.subr.bf16.mxu0 0
  %842 = vmatpush1.bf16.msra.mxu0 %v808
  %843 = vmatprep.subr.bf16.mxu0 0
  %844 = vmatpush1.bf16.msra.mxu0 %v809
  %845 = vmatprep.subr.bf16.mxu0 0
  %846 = vmatpush1.bf16.msra.mxu0 %v810
  %847 = vmatprep.subr.bf16.mxu0 0
  %848 = vmatpush1.bf16.msra.mxu0 %v811
  %849 = vmatprep.subr.bf16.mxu0 0
  %850 = vmatpush1.bf16.msra.mxu0 %v812
  %851 = vmatprep.subr.bf16.mxu0 0
  %852 = vmatpush1.bf16.msra.mxu0 %v813
  %853 = vmatprep.subr.bf16.mxu0 0
  %854 = vmatpush1.bf16.msra.mxu0 %v814
  %855 = vmatprep.subr.bf16.mxu0 0
  %856 = vmatpush1.bf16.msra.mxu0 %v815
  %857 = vmatprep.subr.bf16.mxu0 0
  %858 = vmatpush1.bf16.msra.mxu0 %v816
  %859 = vmatprep.subr.bf16.mxu0 0
  %860 = vmatpush1.bf16.msra.mxu0 %v817
  %861 = vmatprep.subr.bf16.mxu0 0
  %862 = vmatpush1.bf16.msra.mxu0 %v818
  %863 = vmatprep.subr.bf16.mxu0 0
  %864 = vmatpush1.bf16.msra.mxu0 %v819
  %865 = vmatprep.subr.bf16.mxu0 0
  %866 = vmatpush1.bf16.msra.mxu0 %v820
  %867 = vmatprep.subr.bf16.mxu0 0
  %868 = vmatpush1.bf16.msra.mxu0 %v821
  %869 = vmatprep.subr.bf16.mxu0 0
  %870 = vmatpush1.bf16.msra.mxu0 %v822
  %871 = vmatprep.mubr.bf16.mxu0 %v703
  %872 = vmatmul.mubr.bf16.gmra.mrb[0].mxu0 %v702
  %v873 = vpop.f32.mrb[0].mxu0
  %v874 = vadd.f32 %v741, %v873
  %v875 = vpop.f32.mrb[0].mxu0
  %v876 = vpop.f32.mrb[0].mxu0
  %v877 = vadd.f32 %v741, %v876
  %v878 = vpop.f32.mrb[0].mxu0
  %879 = vdwg.mxu0
  %v880 = vlaneseq
  %v881 = vand.u32 %v880, 127
  %vm882 = vcmp.ge.s32.totalorder %v881, 4
  %vm883 = vcmp.lt.s32.totalorder %v881, 8
  %vm884 = vmand %vm882, %vm883
  %v885 = vmax.f32 %v874, 0.0
  %v886 = vmax.f32 %v877, 0.0
  %v887 = vand.u32 2147483647, %v874
  %v888 = vand.u32 2147483647, %v877
  %v889 = vsub.f32 0.0, %v887
  %v890 = vsub.f32 0.0, %v888
  %v891 = vmul.f32 %v889, 1.442695
  %v892 = vpow.pop %v891
  %v893 = vmul.f32 %v890, 1.442695
  %v894 = vpow.pop %v893
  %v895 = vadd.f32 %v892, 1.0
  %v896 = vlog2.pop %v895
  %v897 = vmul.f32 %v896, 0.6931472
  %v898 = vmul.f32 -0.5, %v892
  %v899 = vadd.f32 %v898, 1.0
  %v900 = vmul.f32 %v899, %v892
  %v901 = vand.u32 2147483647, %v892
  %vm902 = vcmp.lt.f32.partialorder %v901, 0.0004427343
  %v903 = vsel %vm902, %v900, %v897
  %v904 = vadd.f32 %v894, 1.0
  %v905 = vlog2.pop %v904
  %v906 = vmul.f32 %v905, 0.6931472
  %v907 = vmul.f32 -0.5, %v894
  %v908 = vadd.f32 %v907, 1.0
  %v909 = vmul.f32 %v908, %v894
  %v910 = vand.u32 2147483647, %v894
  %vm911 = vcmp.lt.f32.partialorder %v910, 0.0004427343
  %v912 = vsel %vm911, %v909, %v906
  %v913 = vadd.f32 %v885, %v903
  %v914 = vadd.f32 %v886, %v912
  %v915 = vadd.f32 %v913, 1e-08
  %v916 = vadd.f32 %v914, 1e-08
  %v917 = vsel %vm884, %v915, %v874
  %v918 = vsel %vm884, %v916, %v877
  %919 = vst [vmem:[%s9] sm:$0xff] %v917
  %920 = vst [vmem:[%s9 + $0x8] sm:$0xff] %v918
  // Predicated region
  $region38: #{gaussian_regressor_split_forward.1} parent=0 // pred_check
    _
  $region39: #{gaussian_regressor_split_forward.1} parent=0 // pred_check_branch
    %922 = sbr.rel (0) target = $region41
  $region40: #{gaussian_regressor_split_forward.1} parent=0 // pred_region
    _
  $region41: #{gaussian_regressor_split_forward.1} parent=0 // pred_fallthru
    _
  // Predicated region
  $region42: #{gaussian_regressor_split_forward.1} parent=0 // pred_check
    _
  $region43: #{gaussian_regressor_split_forward.1} parent=0 // pred_check_branch
    %924 = sbr.rel (0) target = $region45
  $region44: #{gaussian_regressor_split_forward.1} parent=0 // pred_region
    _
  $region45: #{gaussian_regressor_split_forward.1} parent=0 // pred_fallthru
    _

</llo_original>
